<compile_context>
chip_gen: v5e
topology: v5e:2x2
jax: 0.10.0
libtpu: 0.0.40
codegen_flags: <defaults>
</compile_context>

<pallas_src>
import jax
import jax.numpy as jnp
import numpy as np
from jax import lax
from jax.experimental import pallas as pl
from jax.experimental.pallas import tpu as pltpu


def _round_up(x, m):
    return ((x + m - 1) // m) * m


_MXU_MIN_CH = 16          # below this, the 1x1 conv runs as VPU broadcast-FMAs
_VMEM_BUDGET = 12 << 20   # conservative block budget (v5e scoped default is 16 MiB)


# ---------------------------------------------------------------------------
# Fused Pallas kernel
# ---------------------------------------------------------------------------
def _make_ghost_kernel(cin, c1, c2, oup, H, W, nb, pad, use_mxu):
    """Build the fused GhostModule kernel for static shapes (ratio=2 channel map)."""
    S = H * W

    def kernel(x_ref, w1_ref, b1_ref, dw_ref, b2_ref, mlo_ref, mhi_ref,
               out_ref, x1pad_ref):
        # x_ref:     (nb, cin, S)          channels-first, spatial flattened (lane-dense)
        # w1_ref:    (c1, cin)             1x1 primary-conv weight (BN1 scale folded)
        # b1_ref:    (c1, 1)               BN1 folded bias
        # dw_ref:    (c2, 9)               3x3 depthwise weight, taps (ky,kx) row-major,
        #                                  BN2 scale folded in
        # b2_ref:    (c2, 1)               BN2 folded bias
        # mlo_ref:   (1, S)                1.0 where w > 0     (tap needs w-1 >= 0)
        # mhi_ref:   (1, S)                1.0 where w < W-1   (tap needs w+1 <  W)
        # out_ref:   (nb, oup, S)          concat([x1, x2], channel)[:oup]
        # x1pad_ref: (nb, c1, 2*pad + S)   VMEM scratch: per-image x1 with zero halo

        # ---- primary_conv: 1x1 conv (+folded BN scale) + bias + ReLU ----------
        if use_mxu:
            # channels large enough for the systolic array; operands arrive as bf16
            x1 = jnp.stack(
                [jnp.dot(w1_ref[...], x_ref[n],
                         preferred_element_type=jnp.float32)
                 for n in range(nb)], axis=0)                         # (nb, c1, S)
        else:
            # tiny channel counts: cin broadcast FMAs on the VPU, skip the MXU
            x = x_ref[...].astype(jnp.float32)                        # (nb, cin, S)
            x1 = jnp.zeros((nb, c1, S), jnp.float32)
            for i in range(cin):
                x1 = x1 + w1_ref[:, i:i + 1][None] * x[:, i:i + 1, :]
        x1 = jnp.maximum(x1 + b1_ref[...][None], 0.0)                 # (nb, c1, S)

        # ---- stage x1 with a per-image zero halo; zero ONLY the halo bands ----
        x1pad_ref[:, :, 0:pad] = jnp.zeros((nb, c1, pad), jnp.float32)
        x1pad_ref[:, :, pad + S:2 * pad + S] = jnp.zeros((nb, c1, pad), jnp.float32)
        x1pad_ref[:, :, pad:pad + S] = x1

        # ---- cheap_operation: 3x3 depthwise conv + BN + ReLU (ratio=2: c1==c2) ----
        # row boundaries handled by the zero halo; column boundaries by the masks,
        # applied once per dx-group (2 masks total instead of 6 per-tap selects)
        mlo = mlo_ref[...][None]                                      # (1, 1, S)
        mhi = mhi_ref[...][None]                                      # (1, 1, S)
        acc = jnp.zeros((nb, c2, S), jnp.float32)
        for dx_i, dx in enumerate((-1, 0, 1)):
            g = jnp.zeros((nb, c2, S), jnp.float32)
            for dy_i, dy in enumerate((-1, 0, 1)):
                tap = dy_i * 3 + dx_i
                d = dy * W + dx
                view = x1pad_ref[:, :, pad + d:pad + d + S]           # shifted view
                g = g + dw_ref[:, tap:tap + 1][None] * view           # VPU FMA
            if dx == -1:
                g = g * mlo
            elif dx == 1:
                g = g * mhi
            acc = acc + g
        x2 = jnp.maximum(acc + b2_ref[...][None], 0.0)                # (nb, c2, S)

        # ---- out = concat([x1, x2], channel)[:oup] : ONE dense store ----------
        out = jnp.concatenate([x1, x2[:, :oup - c1, :]], axis=1)      # (nb, oup, S)
        out_ref[...] = out.astype(out_ref.dtype)

    return kernel


# ---------------------------------------------------------------------------
# pallas_call wrapper (NCHW in / NCHW out)
# ---------------------------------------------------------------------------
def ghost_module_nchw(x_nchw, w1f, b1, dwf, b2, oup):
    """GhostModule forward, defaults: kernel_size=1, ratio=2, dw_size=3, stride=1, relu=True."""
    N, Cin, H, W = x_nchw.shape
    S = H * W
    C1 = w1f.shape[0]
    C2 = dwf.shape[0]
    if C1 != C2:
        # TODO(synk): ratio > 2 needs an explicit init->new channel replication map
        raise NotImplementedError("Pallas GhostModule supports ratio=2 (c1 == c2) only")

    # halo must cover the largest 3x3 shift (W+1) and stay lane-aligned
    pad = max(128, _round_up(W + 1, 128))

    use_mxu = (Cin >= _MXU_MIN_CH and C1 >= _MXU_MIN_CH)
    in_dtype = jnp.bfloat16 if use_mxu else jnp.float32

    # images per grid step: as many as fit a conservative double-buffered VMEM budget
    per_img = (2 * (Cin * S * jnp.dtype(in_dtype).itemsize + oup * S * 4)
               + C1 * (2 * pad + S) * 4)
    Nb = 1
    for nb in range(1, N + 1):
        if N % nb == 0 and nb * per_img <= _VMEM_BUDGET:
            Nb = nb

    x = x_nchw.reshape(N, Cin, S).astype(in_dtype)    # free merge of trailing dims
    w1_in = w1f.astype(in_dtype)

    # hoisted column-boundary masks (computed once, not per grid step)
    wpos = jnp.arange(S, dtype=jnp.int32) % W
    mlo = (wpos > 0).astype(jnp.float32)[None, :]         # (1, S)
    mhi = (wpos < W - 1).astype(jnp.float32)[None, :]     # (1, S)

    kernel = _make_ghost_kernel(Cin, C1, C2, oup, H, W, Nb, pad, use_mxu)

    out = pl.pallas_call(
        kernel,
        out_shape=jax.ShapeDtypeStruct((N, oup, S), jnp.float32),
        grid_spec=pltpu.PrefetchScalarGridSpec(
            num_scalar_prefetch=0,
            grid=(N // Nb,),
            in_specs=[
                pl.BlockSpec((Nb, Cin, S), lambda n: (n, 0, 0)),
                pl.BlockSpec((C1, Cin), lambda n: (0, 0)),
                pl.BlockSpec((C1, 1), lambda n: (0, 0)),
                pl.BlockSpec((C2, 9), lambda n: (0, 0)),
                pl.BlockSpec((C2, 1), lambda n: (0, 0)),
                pl.BlockSpec((1, S), lambda n: (0, 0)),
                pl.BlockSpec((1, S), lambda n: (0, 0)),
            ],
            out_specs=pl.BlockSpec((Nb, oup, S), lambda n: (n, 0, 0)),
            scratch_shapes=[pltpu.VMEM((Nb, C1, 2 * pad + S), jnp.float32)],
        ),
        compiler_params=pltpu.CompilerParams(
            dimension_semantics=("parallel",)),
    )(x, w1_in, b1, dwf, b2, mlo, mhi)

    return out.reshape(N, oup, H, W)


# ---------------------------------------------------------------------------
# BN folding helper + pure-JAX reference (for correctness check)
# ---------------------------------------------------------------------------
def fold_bn(gamma, beta, mean, var, eps=1e-5):
    scale = gamma / jnp.sqrt(var + eps)
    bias = beta - mean * scale
    return scale, bias


def reference_nchw(x, w1, bn1, dw, bn2, oup, eps=1e-5):
    g1, bt1, m1, v1 = bn1
    g2, bt2, m2, v2 = bn2
    dn = ("NCHW", "OIHW", "NCHW")

    def bn(y, g, bt, m, v):
        s = (g / jnp.sqrt(v + eps))[None, :, None, None]
        return (y - m[None, :, None, None]) * s + bt[None, :, None, None]

    y1 = lax.conv_general_dilated(x, w1, (1, 1), "VALID", dimension_numbers=dn)
    x1 = jnp.maximum(bn(y1, g1, bt1, m1, v1), 0.0)
    y2 = lax.conv_general_dilated(x1, dw, (1, 1), ((1, 1), (1, 1)),
                                  dimension_numbers=dn,
                                  feature_group_count=x1.shape[1])
    x2 = jnp.maximum(bn(y2, g2, bt2, m2, v2), 0.0)
    return jnp.concatenate([x1, x2], axis=1)[:, :oup]


# ---------------------------------------------------------------------------
# main
# ---------------------------------------------------------------------------
if __name__ == "__main__":
    key = jax.random.PRNGKey(0)
    eps = 1e-5

    # GhostModule(inp=4, oup=8) with defaults: kernel_size=1, ratio=2, dw_size=3, stride=1
    N, Cin, H, W = 2, 4, 16, 16
    oup, ratio = 8, 2
    init_ch = -(-oup // ratio)           # ceil(oup / ratio) = 4
    new_ch = init_ch * (ratio - 1)       # 4

    ks = jax.random.split(key, 11)
    x = jax.random.normal(ks[0], (N, Cin, H, W), jnp.float32)

    # conv weights in PyTorch layout (OIHW; depthwise has I=1 because groups=init_ch)
    w1 = 0.3 * jax.random.normal(ks[1], (init_ch, Cin, 1, 1), jnp.float32)
    dw = 0.3 * jax.random.normal(ks[2], (new_ch, 1, 3, 3), jnp.float32)

    # BatchNorm (inference mode) with real running stats
    g1 = 1.0 + 0.1 * jax.random.normal(ks[3], (init_ch,), jnp.float32)
    bt1 = 0.1 * jax.random.normal(ks[4], (init_ch,), jnp.float32)
    m1 = 0.2 * jax.random.normal(ks[5], (init_ch,), jnp.float32)
    v1 = 1.0 + 0.2 * jnp.abs(jax.random.normal(ks[6], (init_ch,), jnp.float32))
    g2 = 1.0 + 0.1 * jax.random.normal(ks[7], (new_ch,), jnp.float32)
    bt2 = 0.1 * jax.random.normal(ks[8], (new_ch,), jnp.float32)
    m2 = 0.2 * jax.random.normal(ks[9], (new_ch,), jnp.float32)
    v2 = 1.0 + 0.2 * jnp.abs(jax.random.normal(ks[10], (new_ch,), jnp.float32))

    # fold BN scale into the conv weights; only a bias add remains in-kernel
    s1, b1 = fold_bn(g1, bt1, m1, v1, eps)
    s2, b2 = fold_bn(g2, bt2, m2, v2, eps)
    w1f = w1[:, :, 0, 0] * s1[:, None]             # (init_ch, Cin)
    dwf = dw.reshape(new_ch, 9) * s2[:, None]      # (new_ch, 9), taps (ky,kx) row-major

    out = ghost_module_nchw(x, w1f, b1[:, None], dwf, b2[:, None], oup)
    out = jax.block_until_ready(out)

    # correctness check against a pure-JAX reference using the raw (unfolded) params
    ref = reference_nchw(x, w1, (g1, bt1, m1, v1), dw, (g2, bt2, m2, v2), oup, eps)
    np.testing.assert_allclose(np.asarray(out), np.asarray(ref), rtol=1e-4, atol=1e-4)

    print("KERNEL_OK")
</pallas_src>

<mosaic_0001>
module attributes {stable_mosaic.version = 11 : i64} {
  func.func @kernel(%arg0: i32, %arg1: memref<2x4x256xf32, #tpu.memory_space<vmem>>, %arg2: memref<4x4xf32, #tpu.memory_space<vmem>>, %arg3: memref<4x1xf32, #tpu.memory_space<vmem>>, %arg4: memref<4x9xf32, #tpu.memory_space<vmem>>, %arg5: memref<4x1xf32, #tpu.memory_space<vmem>>, %arg6: memref<1x256xf32, #tpu.memory_space<vmem>>, %arg7: memref<1x256xf32, #tpu.memory_space<vmem>>, %arg8: memref<2x8x256xf32, #tpu.memory_space<vmem>>, %arg9: memref<2x4x512xf32, #tpu.memory_space<vmem>>) attributes {dimension_semantics = [#tpu.dimension_semantics<parallel>], iteration_bounds = array<i64: 1>, scalar_prefetch = 0 : i64, scratch_operands = 1 : i64, tpu.core_type = #tpu.core_type<tc>, window_params = [{transform_indices = @transform_0, window_bounds = array<i64: 2, 4, 256>}, {pipeline_mode = #tpu.pipeline_mode<synchronous>, transform_indices = @transform_1, window_bounds = array<i64: 4, 4>}, {pipeline_mode = #tpu.pipeline_mode<synchronous>, transform_indices = @transform_2, window_bounds = array<i64: 4, 1>}, {pipeline_mode = #tpu.pipeline_mode<synchronous>, transform_indices = @transform_3, window_bounds = array<i64: 4, 9>}, {pipeline_mode = #tpu.pipeline_mode<synchronous>, transform_indices = @transform_4, window_bounds = array<i64: 4, 1>}, {pipeline_mode = #tpu.pipeline_mode<synchronous>, transform_indices = @transform_5, window_bounds = array<i64: 1, 256>}, {pipeline_mode = #tpu.pipeline_mode<synchronous>, transform_indices = @transform_6, window_bounds = array<i64: 1, 256>}, {transform_indices = @transform_7, window_bounds = array<i64: 2, 8, 256>}]} {
    %c0 = arith.constant 0 : index
    %c0_0 = arith.constant 0 : index
    %c0_1 = arith.constant 0 : index
    %0 = vector.load %arg1[%c0, %c0_0, %c0_1] : memref<2x4x256xf32, #tpu.memory_space<vmem>>, vector<2x4x256xf32>
    %cst = arith.constant 0.000000e+00 : f32
    %1 = vector.broadcast %cst : f32 to vector<2x4x256xf32>
    %c0_2 = arith.constant 0 : index
    %c0_3 = arith.constant 0 : index
    %2 = vector.load %arg2[%c0_2, %c0_3] : memref<4x4xf32, #tpu.memory_space<vmem>>, vector<4x1xf32>
    %3 = vector.shape_cast %2 : vector<4x1xf32> to vector<1x4x1xf32>
    %4 = vector.extract_strided_slice %0 {offsets = [0, 0, 0], sizes = [2, 1, 256], strides = [1, 1, 1]} : vector<2x4x256xf32> to vector<2x1x256xf32>
    %5 = vector.broadcast %3 : vector<1x4x1xf32> to vector<2x4x256xf32>
    %6 = vector.broadcast %4 : vector<2x1x256xf32> to vector<2x4x256xf32>
    %7 = arith.mulf %5, %6 : vector<2x4x256xf32>
    %8 = arith.addf %1, %7 : vector<2x4x256xf32>
    %c0_4 = arith.constant 0 : index
    %c1 = arith.constant 1 : index
    %9 = vector.load %arg2[%c0_4, %c1] : memref<4x4xf32, #tpu.memory_space<vmem>>, vector<4x1xf32>
    %10 = vector.shape_cast %9 : vector<4x1xf32> to vector<1x4x1xf32>
    %11 = vector.extract_strided_slice %0 {offsets = [0, 1, 0], sizes = [2, 1, 256], strides = [1, 1, 1]} : vector<2x4x256xf32> to vector<2x1x256xf32>
    %12 = vector.broadcast %10 : vector<1x4x1xf32> to vector<2x4x256xf32>
    %13 = vector.broadcast %11 : vector<2x1x256xf32> to vector<2x4x256xf32>
    %14 = arith.mulf %12, %13 : vector<2x4x256xf32>
    %15 = arith.addf %8, %14 : vector<2x4x256xf32>
    %c0_5 = arith.constant 0 : index
    %c2 = arith.constant 2 : index
    %16 = vector.load %arg2[%c0_5, %c2] : memref<4x4xf32, #tpu.memory_space<vmem>>, vector<4x1xf32>
    %17 = vector.shape_cast %16 : vector<4x1xf32> to vector<1x4x1xf32>
    %18 = vector.extract_strided_slice %0 {offsets = [0, 2, 0], sizes = [2, 1, 256], strides = [1, 1, 1]} : vector<2x4x256xf32> to vector<2x1x256xf32>
    %19 = vector.broadcast %17 : vector<1x4x1xf32> to vector<2x4x256xf32>
    %20 = vector.broadcast %18 : vector<2x1x256xf32> to vector<2x4x256xf32>
    %21 = arith.mulf %19, %20 : vector<2x4x256xf32>
    %22 = arith.addf %15, %21 : vector<2x4x256xf32>
    %c0_6 = arith.constant 0 : index
    %c3 = arith.constant 3 : index
    %23 = vector.load %arg2[%c0_6, %c3] : memref<4x4xf32, #tpu.memory_space<vmem>>, vector<4x1xf32>
    %24 = vector.shape_cast %23 : vector<4x1xf32> to vector<1x4x1xf32>
    %25 = vector.extract_strided_slice %0 {offsets = [0, 3, 0], sizes = [2, 1, 256], strides = [1, 1, 1]} : vector<2x4x256xf32> to vector<2x1x256xf32>
    %26 = vector.broadcast %24 : vector<1x4x1xf32> to vector<2x4x256xf32>
    %27 = vector.broadcast %25 : vector<2x1x256xf32> to vector<2x4x256xf32>
    %28 = arith.mulf %26, %27 : vector<2x4x256xf32>
    %29 = arith.addf %22, %28 : vector<2x4x256xf32>
    %c0_7 = arith.constant 0 : index
    %c0_8 = arith.constant 0 : index
    %30 = vector.load %arg3[%c0_7, %c0_8] : memref<4x1xf32, #tpu.memory_space<vmem>>, vector<4x1xf32>
    %31 = vector.shape_cast %30 : vector<4x1xf32> to vector<1x4x1xf32>
    %32 = vector.broadcast %31 : vector<1x4x1xf32> to vector<2x4x256xf32>
    %33 = arith.addf %29, %32 : vector<2x4x256xf32>
    %cst_9 = arith.constant 0.000000e+00 : f32
    %34 = vector.broadcast %cst_9 : f32 to vector<2x4x256xf32>
    %35 = arith.maximumf %33, %34 : vector<2x4x256xf32>
    %cst_10 = arith.constant 0.000000e+00 : f32
    %36 = vector.broadcast %cst_10 : f32 to vector<2x4x128xf32>
    %c0_11 = arith.constant 0 : index
    %c0_12 = arith.constant 0 : index
    %c0_13 = arith.constant 0 : index
    %37 = vector.load %arg9[%c0_11, %c0_12, %c0_13] : memref<2x4x512xf32, #tpu.memory_space<vmem>>, vector<2x4x128xf32>
    tpu.vector_store %arg9[%c0_11, %c0_12, %c0_13], %36 {strides = array<i32>} : memref<2x4x512xf32, #tpu.memory_space<vmem>>, vector<2x4x128xf32>,
    %cst_14 = arith.constant 0.000000e+00 : f32
    %38 = vector.broadcast %cst_14 : f32 to vector<2x4x128xf32>
    %c0_15 = arith.constant 0 : index
    %c0_16 = arith.constant 0 : index
    %c384 = arith.constant 384 : index
    %39 = vector.load %arg9[%c0_15, %c0_16, %c384] : memref<2x4x512xf32, #tpu.memory_space<vmem>>, vector<2x4x128xf32>
    tpu.vector_store %arg9[%c0_15, %c0_16, %c384], %38 {strides = array<i32>} : memref<2x4x512xf32, #tpu.memory_space<vmem>>, vector<2x4x128xf32>,
    %c0_17 = arith.constant 0 : index
    %c0_18 = arith.constant 0 : index
    %c128 = arith.constant 128 : index
    %40 = vector.load %arg9[%c0_17, %c0_18, %c128] : memref<2x4x512xf32, #tpu.memory_space<vmem>>, vector<2x4x256xf32>
    tpu.vector_store %arg9[%c0_17, %c0_18, %c128], %35 {strides = array<i32>} : memref<2x4x512xf32, #tpu.memory_space<vmem>>, vector<2x4x256xf32>,
    %c0_19 = arith.constant 0 : index
    %c0_20 = arith.constant 0 : index
    %41 = vector.load %arg6[%c0_19, %c0_20] : memref<1x256xf32, #tpu.memory_space<vmem>>, vector<1x256xf32>
    %42 = vector.shape_cast %41 : vector<1x256xf32> to vector<1x1x256xf32>
    %c0_21 = arith.constant 0 : index
    %c0_22 = arith.constant 0 : index
    %43 = vector.load %arg7[%c0_21, %c0_22] : memref<1x256xf32, #tpu.memory_space<vmem>>, vector<1x256xf32>
    %44 = vector.shape_cast %43 : vector<1x256xf32> to vector<1x1x256xf32>
    %cst_23 = arith.constant 0.000000e+00 : f32
    %45 = vector.broadcast %cst_23 : f32 to vector<2x4x256xf32>
    %cst_24 = arith.constant 0.000000e+00 : f32
    %46 = vector.broadcast %cst_24 : f32 to vector<2x4x256xf32>
    %c0_25 = arith.constant 0 : index
    %c0_26 = arith.constant 0 : index
    %c111 = arith.constant 111 : index
    %47 = vector.load %arg9[%c0_25, %c0_26, %c111] : memref<2x4x512xf32, #tpu.memory_space<vmem>>, vector<2x4x256xf32>
    %c0_27 = arith.constant 0 : index
    %c0_28 = arith.constant 0 : index
    %48 = vector.load %arg4[%c0_27, %c0_28] : memref<4x9xf32, #tpu.memory_space<vmem>>, vector<4x1xf32>
    %49 = vector.shape_cast %48 : vector<4x1xf32> to vector<1x4x1xf32>
    %50 = vector.broadcast %49 : vector<1x4x1xf32> to vector<2x4x256xf32>
    %51 = arith.mulf %50, %47 : vector<2x4x256xf32>
    %52 = arith.addf %46, %51 : vector<2x4x256xf32>
    %c0_29 = arith.constant 0 : index
    %c0_30 = arith.constant 0 : index
    %c127 = arith.constant 127 : index
    %53 = vector.load %arg9[%c0_29, %c0_30, %c127] : memref<2x4x512xf32, #tpu.memory_space<vmem>>, vector<2x4x256xf32>
    %c0_31 = arith.constant 0 : index
    %c3_32 = arith.constant 3 : index
    %54 = vector.load %arg4[%c0_31, %c3_32] : memref<4x9xf32, #tpu.memory_space<vmem>>, vector<4x1xf32>
    %55 = vector.shape_cast %54 : vector<4x1xf32> to vector<1x4x1xf32>
    %56 = vector.broadcast %55 : vector<1x4x1xf32> to vector<2x4x256xf32>
    %57 = arith.mulf %56, %53 : vector<2x4x256xf32>
    %58 = arith.addf %52, %57 : vector<2x4x256xf32>
    %c0_33 = arith.constant 0 : index
    %c0_34 = arith.constant 0 : index
    %c143 = arith.constant 143 : index
    %59 = vector.load %arg9[%c0_33, %c0_34, %c143] : memref<2x4x512xf32, #tpu.memory_space<vmem>>, vector<2x4x256xf32>
    %c0_35 = arith.constant 0 : index
    %c6 = arith.constant 6 : index
    %60 = vector.load %arg4[%c0_35, %c6] : memref<4x9xf32, #tpu.memory_space<vmem>>, vector<4x1xf32>
    %61 = vector.shape_cast %60 : vector<4x1xf32> to vector<1x4x1xf32>
    %62 = vector.broadcast %61 : vector<1x4x1xf32> to vector<2x4x256xf32>
    %63 = arith.mulf %62, %59 : vector<2x4x256xf32>
    %64 = arith.addf %58, %63 : vector<2x4x256xf32>
    %65 = vector.broadcast %42 : vector<1x1x256xf32> to vector<2x4x256xf32>
    %66 = arith.mulf %64, %65 : vector<2x4x256xf32>
    %67 = arith.addf %45, %66 : vector<2x4x256xf32>
    %cst_36 = arith.constant 0.000000e+00 : f32
    %68 = vector.broadcast %cst_36 : f32 to vector<2x4x256xf32>
    %c0_37 = arith.constant 0 : index
    %c0_38 = arith.constant 0 : index
    %c112 = arith.constant 112 : index
    %69 = vector.load %arg9[%c0_37, %c0_38, %c112] : memref<2x4x512xf32, #tpu.memory_space<vmem>>, vector<2x4x256xf32>
    %c0_39 = arith.constant 0 : index
    %c1_40 = arith.constant 1 : index
    %70 = vector.load %arg4[%c0_39, %c1_40] : memref<4x9xf32, #tpu.memory_space<vmem>>, vector<4x1xf32>
    %71 = vector.shape_cast %70 : vector<4x1xf32> to vector<1x4x1xf32>
    %72 = vector.broadcast %71 : vector<1x4x1xf32> to vector<2x4x256xf32>
    %73 = arith.mulf %72, %69 : vector<2x4x256xf32>
    %74 = arith.addf %68, %73 : vector<2x4x256xf32>
    %c0_41 = arith.constant 0 : index
    %c0_42 = arith.constant 0 : index
    %c128_43 = arith.constant 128 : index
    %75 = vector.load %arg9[%c0_41, %c0_42, %c128_43] : memref<2x4x512xf32, #tpu.memory_space<vmem>>, vector<2x4x256xf32>
    %c0_44 = arith.constant 0 : index
    %c4 = arith.constant 4 : index
    %76 = vector.load %arg4[%c0_44, %c4] : memref<4x9xf32, #tpu.memory_space<vmem>>, vector<4x1xf32>
    %77 = vector.shape_cast %76 : vector<4x1xf32> to vector<1x4x1xf32>
    %78 = vector.broadcast %77 : vector<1x4x1xf32> to vector<2x4x256xf32>
    %79 = arith.mulf %78, %75 : vector<2x4x256xf32>
    %80 = arith.addf %74, %79 : vector<2x4x256xf32>
    %c0_45 = arith.constant 0 : index
    %c0_46 = arith.constant 0 : index
    %c144 = arith.constant 144 : index
    %81 = vector.load %arg9[%c0_45, %c0_46, %c144] : memref<2x4x512xf32, #tpu.memory_space<vmem>>, vector<2x4x256xf32>
    %c0_47 = arith.constant 0 : index
    %c7 = arith.constant 7 : index
    %82 = vector.load %arg4[%c0_47, %c7] : memref<4x9xf32, #tpu.memory_space<vmem>>, vector<4x1xf32>
    %83 = vector.shape_cast %82 : vector<4x1xf32> to vector<1x4x1xf32>
    %84 = vector.broadcast %83 : vector<1x4x1xf32> to vector<2x4x256xf32>
    %85 = arith.mulf %84, %81 : vector<2x4x256xf32>
    %86 = arith.addf %80, %85 : vector<2x4x256xf32>
    %87 = arith.addf %67, %86 : vector<2x4x256xf32>
    %cst_48 = arith.constant 0.000000e+00 : f32
    %88 = vector.broadcast %cst_48 : f32 to vector<2x4x256xf32>
    %c0_49 = arith.constant 0 : index
    %c0_50 = arith.constant 0 : index
    %c113 = arith.constant 113 : index
    %89 = vector.load %arg9[%c0_49, %c0_50, %c113] : memref<2x4x512xf32, #tpu.memory_space<vmem>>, vector<2x4x256xf32>
    %c0_51 = arith.constant 0 : index
    %c2_52 = arith.constant 2 : index
    %90 = vector.load %arg4[%c0_51, %c2_52] : memref<4x9xf32, #tpu.memory_space<vmem>>, vector<4x1xf32>
    %91 = vector.shape_cast %90 : vector<4x1xf32> to vector<1x4x1xf32>
    %92 = vector.broadcast %91 : vector<1x4x1xf32> to vector<2x4x256xf32>
    %93 = arith.mulf %92, %89 : vector<2x4x256xf32>
    %94 = arith.addf %88, %93 : vector<2x4x256xf32>
    %c0_53 = arith.constant 0 : index
    %c0_54 = arith.constant 0 : index
    %c129 = arith.constant 129 : index
    %95 = vector.load %arg9[%c0_53, %c0_54, %c129] : memref<2x4x512xf32, #tpu.memory_space<vmem>>, vector<2x4x256xf32>
    %c0_55 = arith.constant 0 : index
    %c5 = arith.constant 5 : index
    %96 = vector.load %arg4[%c0_55, %c5] : memref<4x9xf32, #tpu.memory_space<vmem>>, vector<4x1xf32>
    %97 = vector.shape_cast %96 : vector<4x1xf32> to vector<1x4x1xf32>
    %98 = vector.broadcast %97 : vector<1x4x1xf32> to vector<2x4x256xf32>
    %99 = arith.mulf %98, %95 : vector<2x4x256xf32>
    %100 = arith.addf %94, %99 : vector<2x4x256xf32>
    %c0_56 = arith.constant 0 : index
    %c0_57 = arith.constant 0 : index
    %c145 = arith.constant 145 : index
    %101 = vector.load %arg9[%c0_56, %c0_57, %c145] : memref<2x4x512xf32, #tpu.memory_space<vmem>>, vector<2x4x256xf32>
    %c0_58 = arith.constant 0 : index
    %c8 = arith.constant 8 : index
    %102 = vector.load %arg4[%c0_58, %c8] : memref<4x9xf32, #tpu.memory_space<vmem>>, vector<4x1xf32>
    %103 = vector.shape_cast %102 : vector<4x1xf32> to vector<1x4x1xf32>
    %104 = vector.broadcast %103 : vector<1x4x1xf32> to vector<2x4x256xf32>
    %105 = arith.mulf %104, %101 : vector<2x4x256xf32>
    %106 = arith.addf %100, %105 : vector<2x4x256xf32>
    %107 = vector.broadcast %44 : vector<1x1x256xf32> to vector<2x4x256xf32>
    %108 = arith.mulf %106, %107 : vector<2x4x256xf32>
    %109 = arith.addf %87, %108 : vector<2x4x256xf32>
    %c0_59 = arith.constant 0 : index
    %c0_60 = arith.constant 0 : index
    %110 = vector.load %arg5[%c0_59, %c0_60] : memref<4x1xf32, #tpu.memory_space<vmem>>, vector<4x1xf32>
    %111 = vector.shape_cast %110 : vector<4x1xf32> to vector<1x4x1xf32>
    %112 = vector.broadcast %111 : vector<1x4x1xf32> to vector<2x4x256xf32>
    %113 = arith.addf %109, %112 : vector<2x4x256xf32>
    %cst_61 = arith.constant 0.000000e+00 : f32
    %114 = vector.broadcast %cst_61 : f32 to vector<2x4x256xf32>
    %115 = arith.maximumf %113, %114 : vector<2x4x256xf32>
    %116 = tpu.concatenate %35, %115 in 1 : vector<2x4x256xf32>, vector<2x4x256xf32> -> vector<2x8x256xf32>
    %c0_62 = arith.constant 0 : index
    %c0_63 = arith.constant 0 : index
    %c0_64 = arith.constant 0 : index
    %117 = vector.load %arg8[%c0_62, %c0_63, %c0_64] : memref<2x8x256xf32, #tpu.memory_space<vmem>>, vector<2x8x256xf32>
    tpu.vector_store %arg8[%c0_62, %c0_63, %c0_64], %116 {strides = array<i32>} : memref<2x8x256xf32, #tpu.memory_space<vmem>>, vector<2x8x256xf32>,
    return
  }
  func.func @transform_0(%arg0: i32) -> (i32, i32, i32) {
    %c0_i32 = arith.constant 0 : i32
    %c0_i32_0 = arith.constant 0 : i32
    %c0_i32_1 = arith.constant 0 : i32
    return %arg0, %c0_i32, %c0_i32_0 : i32, i32, i32
  }
  func.func @transform_1(%arg0: i32) -> (i32, i32) {
    %c0_i32 = arith.constant 0 : i32
    %c0_i32_0 = arith.constant 0 : i32
    %c0_i32_1 = arith.constant 0 : i32
    return %c0_i32, %c0_i32_0 : i32, i32
  }
  func.func @transform_2(%arg0: i32) -> (i32, i32) {
    %c0_i32 = arith.constant 0 : i32
    %c0_i32_0 = arith.constant 0 : i32
    %c0_i32_1 = arith.constant 0 : i32
    return %c0_i32, %c0_i32_0 : i32, i32
  }
  func.func @transform_3(%arg0: i32) -> (i32, i32) {
    %c0_i32 = arith.constant 0 : i32
    %c0_i32_0 = arith.constant 0 : i32
    %c0_i32_1 = arith.constant 0 : i32
    return %c0_i32, %c0_i32_0 : i32, i32
  }
  func.func @transform_4(%arg0: i32) -> (i32, i32) {
    %c0_i32 = arith.constant 0 : i32
    %c0_i32_0 = arith.constant 0 : i32
    %c0_i32_1 = arith.constant 0 : i32
    return %c0_i32, %c0_i32_0 : i32, i32
  }
  func.func @transform_5(%arg0: i32) -> (i32, i32) {
    %c0_i32 = arith.constant 0 : i32
    %c0_i32_0 = arith.constant 0 : i32
    %c0_i32_1 = arith.constant 0 : i32
    return %c0_i32, %c0_i32_0 : i32, i32
  }
  func.func @transform_6(%arg0: i32) -> (i32, i32) {
    %c0_i32 = arith.constant 0 : i32
    %c0_i32_0 = arith.constant 0 : i32
    %c0_i32_1 = arith.constant 0 : i32
    return %c0_i32, %c0_i32_0 : i32, i32
  }
  func.func @transform_7(%arg0: i32) -> (i32, i32, i32) {
    %c0_i32 = arith.constant 0 : i32
    %c0_i32_0 = arith.constant 0 : i32
    %c0_i32_1 = arith.constant 0 : i32
    return %arg0, %c0_i32, %c0_i32_0 : i32, i32, i32
  }
}

</mosaic_0001>

<llo_original>
// kernel: tpu_custom_call.1
$region0: #{tpu_custom_call.1}
  #allocation0 [shape = 'u32[]', space=smem, size = 0x4, offset = 0x4, fixed_abs, tag = 'smem constant byte address 0x4 - core index']
  #allocation1 [shape = 'u32[72,128]{1,0:T(1,128)}', space=vmem, size = 0x9000, scoped, tag = 'internal scratch']
  #allocation2 [shape = 'f32[2,4,512]{2,1,0:T(4,128)}', space=vmem, size = 0x4000, scoped, tag = 'scratch operand']
  %s0 = inlined_call_operand.hbm [shape: f32[2,4,256], index: 0, kind: input, shape index: {}]
  %s1 = inlined_call_operand.vmem [shape: f32[4,4], index: 1, kind: input, shape index: {}]
  %s2 = inlined_call_operand.vmem [shape: f32[4,1], index: 2, kind: input, shape index: {}]
  %s3 = inlined_call_operand.vmem [shape: f32[4,9], index: 3, kind: input, shape index: {}]
  %s4 = inlined_call_operand.vmem [shape: f32[4,1], index: 4, kind: input, shape index: {}]
  %s5 = inlined_call_operand.vmem [shape: f32[1,256], index: 5, kind: input, shape index: {}]
  %s6 = inlined_call_operand.vmem [shape: f32[1,256], index: 6, kind: input, shape index: {}]
  %s7 = inlined_call_operand.hbm [shape: f32[2,8,256], index: 7, kind: output, shape index: {}]
  %s8 = sld [smem:[#allocation0]]
  $region42: #{tpu_custom_call.1} parent=0
    _
  %s10 = ssub.s32 1, %s8
  %s11 = scalar_select 0, %s10, %s8
  $region1: #{tpu_custom_call.1} parent=0
    #allocation3 [shape = 'u8[8192]{0}', space=vmem, size = 0x2000, scoped, tag = 'input window, operand 0, single buffered']
    #allocation4 [shape = 's32[1]{0}', space=sflag, size = 0x4, scoped, tag = 'scoped memory for tpu_custom_call.1']
    #allocation5 [shape = 's32[1]{0}', space=sflag, size = 0x4, scoped, tag = 'scoped memory for tpu_custom_call.1']
    #allocation6 [shape = 'u8[16384]{0}', space=vmem, size = 0x4000, scoped, tag = 'output window, operand 0, single buffered']
    %12 = vsyncpa [#allocation4], 0
    %13 = vsyncpa [#allocation5], 0
    // Predicated region
    $region2: #{tpu_custom_call.1} parent=1 // pred_check
      _
    $region3: #{tpu_custom_call.1} parent=1 // pred_check_branch
      %15 = sbr.rel (0) target = $region5
    $region4: #{tpu_custom_call.1} parent=1 // pred_region
      %17 = vsyncadd [#allocation4], 0
      %s18 = sshll.u32 %s0, 4
      %s19 = int_to_ptr.hbm [resolvable:$true] %s18
      %s20 = sshll.u32 [#allocation3], 4
      %s21 = int_to_ptr.vmem [resolvable:$true] %s20
      %26 = dma.hbm_to_vmem [thread:$0]  %s19, 256, %s21, [#allocation4], 128, 128, 8
    $region5: #{tpu_custom_call.1} parent=1 // pred_fallthru
      _
    // Predicated region
    $region6: #{tpu_custom_call.1} parent=1 // pred_check
      _
    $region7: #{tpu_custom_call.1} parent=1 // pred_check_branch
      %28 = sbr.rel (0) target = $region9
    $region8: #{tpu_custom_call.1} parent=1 // pred_region
      _
    $region9: #{tpu_custom_call.1} parent=1 // pred_fallthru
      _
    // Predicated region
    $region10: #{tpu_custom_call.1} parent=1 // pred_check
      _
    $region11: #{tpu_custom_call.1} parent=1 // pred_check_branch
      %30 = sbr.rel (0) target = $region13
    $region12: #{tpu_custom_call.1} parent=1 // pred_region
      _
    $region13: #{tpu_custom_call.1} parent=1 // pred_fallthru
      _
    // Predicated region
    $region14: #{tpu_custom_call.1} parent=1 // pred_check
      _
    $region15: #{tpu_custom_call.1} parent=1 // pred_check_branch
      %32 = sbr.rel (0) target = $region17
    $region16: #{tpu_custom_call.1} parent=1 // pred_region
      _
    $region17: #{tpu_custom_call.1} parent=1 // pred_fallthru
      _
    // Predicated region
    $region18: #{tpu_custom_call.1} parent=1 // pred_check
      _
    $region19: #{tpu_custom_call.1} parent=1 // pred_check_branch
      %34 = sbr.rel (0) target = $region21
    $region20: #{tpu_custom_call.1} parent=1 // pred_region
      _
    $region21: #{tpu_custom_call.1} parent=1 // pred_fallthru
      _
    // Predicated region
    $region22: #{tpu_custom_call.1} parent=1 // pred_check
      _
    $region23: #{tpu_custom_call.1} parent=1 // pred_check_branch
      %36 = sbr.rel (0) target = $region25
    $region24: #{tpu_custom_call.1} parent=1 // pred_region
      _
    $region25: #{tpu_custom_call.1} parent=1 // pred_fallthru
      _
    // Predicated region
    $region26: #{tpu_custom_call.1} parent=1 // pred_check
      _
    $region27: #{tpu_custom_call.1} parent=1 // pred_check_branch
      %38 = sbr.rel (0) target = $region29
    $region28: #{tpu_custom_call.1} parent=1 // pred_region
      _
    $region29: #{tpu_custom_call.1} parent=1 // pred_fallthru
      _
    // Predicated region
    $region30: #{tpu_custom_call.1} parent=1 // pred_check
      _
    $region31: #{tpu_custom_call.1} parent=1 // pred_check_branch
      %40 = sbr.rel (0) target = $region33
    $region32: #{tpu_custom_call.1} parent=1 // pred_region
      %42 = dma.done [#allocation4], 256
    $region33: #{tpu_custom_call.1} parent=1 // pred_fallthru
      _
    %v43 = vld [vmem:[#allocation3] sm:$0xff]
    %v44 = vld [vmem:[#allocation3 + $0x8] sm:$0xff]
    %v45 = vld [vmem:[%s1] sm:$0xf]
    %47 = vset.pattern.permute.xlu0 0
    %48 = vperm.xlu0 %47, %v45
    %v49 = vpop.permute.xlu0 %48
    %v53 = vperm.slane %v43, 0
    %v54 = vperm.slane %v43, 4
    %v55 = vperm.slane %v44, 0
    %v56 = vperm.slane %v44, 4
    %v61 = vperm.slane %v53, 0
    %v62 = vperm.slane %v54, 0
    %v63 = vperm.slane %v55, 0
    %v64 = vperm.slane %v56, 0
    %v65 = vmul.f32 %v49, %v61
    %v66 = vmul.f32 %v49, %v62
    %v67 = vmul.f32 %v49, %v63
    %v68 = vmul.f32 %v49, %v64
    %v69 = vadd.f32 %v65, 0.0
    %v70 = vadd.f32 %v66, 0.0
    %v71 = vadd.f32 %v67, 0.0
    %v72 = vadd.f32 %v68, 0.0
    %73 = vset.pattern.permute.xlu0 1
    %74 = vperm.xlu0 %73, %v45
    %v75 = vpop.permute.xlu0 %74
    %v77 = vperm.slane %v43, 1
    %v78 = vperm.slane %v43, 5
    %v79 = vperm.slane %v44, 1
    %v80 = vperm.slane %v44, 5
    %v85 = vperm.slane %v77, 1
    %v86 = vperm.slane %v78, 1
    %v87 = vperm.slane %v79, 1
    %v88 = vperm.slane %v80, 1
    %v89 = vmul.f32 %v75, %v85
    %v90 = vmul.f32 %v75, %v86
    %v91 = vmul.f32 %v75, %v87
    %v92 = vmul.f32 %v75, %v88
    %v93 = vadd.f32 %v69, %v89
    %v94 = vadd.f32 %v70, %v90
    %v95 = vadd.f32 %v71, %v91
    %v96 = vadd.f32 %v72, %v92
    %97 = vset.pattern.permute.xlu0 2
    %98 = vperm.xlu0 %97, %v45
    %v99 = vpop.permute.xlu0 %98
    %v101 = vperm.slane %v43, 2
    %v102 = vperm.slane %v43, 6
    %v103 = vperm.slane %v44, 2
    %v104 = vperm.slane %v44, 6
    %v109 = vperm.slane %v101, 2
    %v110 = vperm.slane %v102, 2
    %v111 = vperm.slane %v103, 2
    %v112 = vperm.slane %v104, 2
    %v113 = vmul.f32 %v99, %v109
    %v114 = vmul.f32 %v99, %v110
    %v115 = vmul.f32 %v99, %v111
    %v116 = vmul.f32 %v99, %v112
    %v117 = vadd.f32 %v93, %v113
    %v118 = vadd.f32 %v94, %v114
    %v119 = vadd.f32 %v95, %v115
    %v120 = vadd.f32 %v96, %v116
    %121 = vset.pattern.permute.xlu0 3
    %122 = vperm.xlu0 %121, %v45
    %v123 = vpop.permute.xlu0 %122
    %v125 = vperm.slane %v43, 3
    %v126 = vperm.slane %v43, 7
    %v127 = vperm.slane %v44, 3
    %v128 = vperm.slane %v44, 7
    %v133 = vperm.slane %v125, 3
    %v134 = vperm.slane %v126, 3
    %v135 = vperm.slane %v127, 3
    %v136 = vperm.slane %v128, 3
    %v137 = vmul.f32 %v123, %v133
    %v138 = vmul.f32 %v123, %v134
    %v139 = vmul.f32 %v123, %v135
    %v140 = vmul.f32 %v123, %v136
    %v141 = vadd.f32 %v117, %v137
    %v142 = vadd.f32 %v118, %v138
    %v143 = vadd.f32 %v119, %v139
    %v144 = vadd.f32 %v120, %v140
    %v145 = vld [vmem:[%s2] sm:$0xf]
    %147 = vset.pattern.permute.xlu0 0
    %148 = vperm.xlu0 %147, %v145
    %v149 = vpop.permute.xlu0 %148
    %v151 = vadd.f32 %v141, %v149
    %v152 = vadd.f32 %v142, %v149
    %v153 = vadd.f32 %v143, %v149
    %v154 = vadd.f32 %v144, %v149
    %v155 = vmax.f32 %v151, 0.0
    %v156 = vmax.f32 %v152, 0.0
    %v157 = vmax.f32 %v153, 0.0
    %v158 = vmax.f32 %v154, 0.0
    %159 = vst [vmem:[#allocation2] sm:$0xf] 0.0
    %160 = vst [vmem:[#allocation2 + $0x10] sm:$0xf] 0.0
    %161 = vst [vmem:[#allocation2 + $0xc] sm:$0xf] 0.0
    %162 = vst [vmem:[#allocation2 + $0x1c] sm:$0xf] 0.0
    %v167 = vrot.slane %v156, 4
    %v168 = vrot.slane %v158, 4
    %vm169 = vcmask 1043456
    %v170 = vsel %vm169, %v155, %v167
    %v171 = vsel %vm169, %v157, %v168
    %174 = vst [vmem:[#allocation2 + $0x4] sm:$0xff] %v170
    %175 = vst [vmem:[#allocation2 + $0x14] sm:$0xff] %v171
    %v176 = vld [vmem:[%s5] sm:$0x3]
    %v177 = vld [vmem:[%s6] sm:$0x3]
    %v178 = vld [vmem:[#allocation2] sm:$0xff]
    %v179 = vld [vmem:[#allocation2 + $0x8] sm:$0xf]
    %v180 = vld [vmem:[#allocation2 + $0x10] sm:$0xff]
    %v181 = vld [vmem:[#allocation2 + $0x18] sm:$0xf]
    %v182 = vld [vmem:[%s3] sm:$0xf]
    %184 = vset.pattern.permute.xlu0 0
    %185 = vperm.xlu0 %184, %v182
    %v186 = vpop.permute.xlu0 %185
    %192 = vst [vmem:[#allocation1] ss:$2 sm:$0xff] %v178
    %s193 = scalar_lea.vmem [#allocation1], 16
    %194 = vst [vmem:[%s193] ss:$2 sm:$0xff] %v179
    %v195 = vld.sshfl [vmem:[#allocation1] sm:$0xff pattern:$0x75316420]
    %v196 = vld.sshfl [vmem:[#allocation1 + $0x8] sm:$0xff pattern:$0x75316420]
    %v197 = vld.sshfl [vmem:[#allocation1 + $0x10] sm:$0xff pattern:$0x75316420]
    %s198 = scalar_lea.vmem [#allocation1], 32
    %199 = vst [vmem:[%s198] ss:$2 sm:$0xff] %v180
    %s200 = scalar_lea.vmem [#allocation1], 48
    %201 = vst [vmem:[%s200] ss:$2 sm:$0xff] %v181
    %v202 = vld.sshfl [vmem:[#allocation1 + $0x20] sm:$0xff pattern:$0x75316420]
    %v203 = vld.sshfl [vmem:[#allocation1 + $0x28] sm:$0xff pattern:$0x75316420]
    %v204 = vld.sshfl [vmem:[#allocation1 + $0x30] sm:$0xff pattern:$0x75316420]
    %205 = vrot.lane.b32.xlu0 %v195, 17
    %v206 = vpop.permute.xlu0 %205
    %207 = vrot.lane.b32.xlu0 %v196, 17
    %v208 = vpop.permute.xlu0 %207
    %209 = vrot.lane.b32.xlu0 %v197, 17
    %v210 = vpop.permute.xlu0 %209
    %211 = vrot.lane.b32.xlu0 %v202, 17
    %v212 = vpop.permute.xlu0 %211
    %213 = vrot.lane.b32.xlu0 %v203, 17
    %v214 = vpop.permute.xlu0 %213
    %215 = vrot.lane.b32.xlu0 %v204, 17
    %v216 = vpop.permute.xlu0 %215
    %vm217 = vcmask 138240
    %v218 = vsel %vm217, %v206, %v208
    %v219 = vsel %vm217, %v208, %v210
    %v220 = vsel %vm217, %v212, %v214
    %v221 = vsel %vm217, %v214, %v216
    %v226 = vmul.f32 %v186, %v218
    %v227 = vmul.f32 %v186, %v219
    %v228 = vmul.f32 %v186, %v220
    %v229 = vmul.f32 %v186, %v221
    %v230 = vadd.f32 %v226, 0.0
    %v231 = vadd.f32 %v227, 0.0
    %v232 = vadd.f32 %v228, 0.0
    %v233 = vadd.f32 %v229, 0.0
    %v234 = vld [vmem:[#allocation2] sm:$0xff]
    %v235 = vld [vmem:[#allocation2 + $0x8] sm:$0xf]
    %v236 = vld [vmem:[#allocation2 + $0x10] sm:$0xff]
    %v237 = vld [vmem:[#allocation2 + $0x18] sm:$0xf]
    %v238 = vld [vmem:[%s3] sm:$0xf]
    %240 = vset.pattern.permute.xlu0 3
    %241 = vperm.xlu0 %240, %v238
    %v242 = vpop.permute.xlu0 %241
    %248 = vst [vmem:[#allocation1] ss:$2 sm:$0xff] %v234
    %s249 = scalar_lea.vmem [#allocation1], 16
    %250 = vst [vmem:[%s249] ss:$2 sm:$0xff] %v235
    %v251 = vld.sshfl [vmem:[#allocation1] sm:$0xff pattern:$0x75316420]
    %v252 = vld.sshfl [vmem:[#allocation1 + $0x8] sm:$0xff pattern:$0x75316420]
    %v253 = vld.sshfl [vmem:[#allocation1 + $0x10] sm:$0xff pattern:$0x75316420]
    %s254 = scalar_lea.vmem [#allocation1], 32
    %255 = vst [vmem:[%s254] ss:$2 sm:$0xff] %v236
    %s256 = scalar_lea.vmem [#allocation1], 48
    %257 = vst [vmem:[%s256] ss:$2 sm:$0xff] %v237
    %v258 = vld.sshfl [vmem:[#allocation1 + $0x20] sm:$0xff pattern:$0x75316420]
    %v259 = vld.sshfl [vmem:[#allocation1 + $0x28] sm:$0xff pattern:$0x75316420]
    %v260 = vld.sshfl [vmem:[#allocation1 + $0x30] sm:$0xff pattern:$0x75316420]
    %261 = vrot.lane.b32.xlu0 %v251, 1
    %v262 = vpop.permute.xlu0 %261
    %263 = vrot.lane.b32.xlu0 %v252, 1
    %v264 = vpop.permute.xlu0 %263
    %265 = vrot.lane.b32.xlu0 %v253, 1
    %v266 = vpop.permute.xlu0 %265
    %267 = vrot.lane.b32.xlu0 %v258, 1
    %v268 = vpop.permute.xlu0 %267
    %269 = vrot.lane.b32.xlu0 %v259, 1
    %v270 = vpop.permute.xlu0 %269
    %271 = vrot.lane.b32.xlu0 %v260, 1
    %v272 = vpop.permute.xlu0 %271
    %vm273 = vcmask 7168
    %v274 = vsel %vm273, %v262, %v264
    %v275 = vsel %vm273, %v264, %v266
    %v276 = vsel %vm273, %v268, %v270
    %v277 = vsel %vm273, %v270, %v272
    %v282 = vmul.f32 %v242, %v274
    %v283 = vmul.f32 %v242, %v275
    %v284 = vmul.f32 %v242, %v276
    %v285 = vmul.f32 %v242, %v277
    %v286 = vadd.f32 %v230, %v282
    %v287 = vadd.f32 %v231, %v283
    %v288 = vadd.f32 %v232, %v284
    %v289 = vadd.f32 %v233, %v285
    %v290 = vld [vmem:[#allocation2 + $0x4] sm:$0xff]
    %v291 = vld [vmem:[#allocation2 + $0xc] sm:$0xf]
    %v292 = vld [vmem:[#allocation2 + $0x14] sm:$0xff]
    %v293 = vld [vmem:[#allocation2 + $0x1c] sm:$0xf]
    %v294 = vld [vmem:[%s3] sm:$0xf]
    %296 = vset.pattern.permute.xlu0 6
    %297 = vperm.xlu0 %296, %v294
    %v298 = vpop.permute.xlu0 %297
    %304 = vst [vmem:[#allocation1] ss:$2 sm:$0xff] %v290
    %s305 = scalar_lea.vmem [#allocation1], 16
    %306 = vst [vmem:[%s305] ss:$2 sm:$0xff] %v291
    %v307 = vld.sshfl [vmem:[#allocation1] sm:$0xff pattern:$0x75316420]
    %v308 = vld.sshfl [vmem:[#allocation1 + $0x8] sm:$0xff pattern:$0x75316420]
    %v309 = vld.sshfl [vmem:[#allocation1 + $0x10] sm:$0xff pattern:$0x75316420]
    %s310 = scalar_lea.vmem [#allocation1], 32
    %311 = vst [vmem:[%s310] ss:$2 sm:$0xff] %v292
    %s312 = scalar_lea.vmem [#allocation1], 48
    %313 = vst [vmem:[%s312] ss:$2 sm:$0xff] %v293
    %v314 = vld.sshfl [vmem:[#allocation1 + $0x20] sm:$0xff pattern:$0x75316420]
    %v315 = vld.sshfl [vmem:[#allocation1 + $0x28] sm:$0xff pattern:$0x75316420]
    %v316 = vld.sshfl [vmem:[#allocation1 + $0x30] sm:$0xff pattern:$0x75316420]
    %317 = vrot.lane.b32.xlu0 %v307, 113
    %v318 = vpop.permute.xlu0 %317
    %319 = vrot.lane.b32.xlu0 %v308, 113
    %v320 = vpop.permute.xlu0 %319
    %321 = vrot.lane.b32.xlu0 %v309, 113
    %v322 = vpop.permute.xlu0 %321
    %323 = vrot.lane.b32.xlu0 %v314, 113
    %v324 = vpop.permute.xlu0 %323
    %325 = vrot.lane.b32.xlu0 %v315, 113
    %v326 = vpop.permute.xlu0 %325
    %327 = vrot.lane.b32.xlu0 %v316, 113
    %v328 = vpop.permute.xlu0 %327
    %vm329 = vcmask 924672
    %v330 = vsel %vm329, %v318, %v320
    %v331 = vsel %vm329, %v320, %v322
    %v332 = vsel %vm329, %v324, %v326
    %v333 = vsel %vm329, %v326, %v328
    %v338 = vmul.f32 %v298, %v330
    %v339 = vmul.f32 %v298, %v331
    %v340 = vmul.f32 %v298, %v332
    %v341 = vmul.f32 %v298, %v333
    %v342 = vadd.f32 %v286, %v338
    %v343 = vadd.f32 %v287, %v339
    %v344 = vadd.f32 %v288, %v340
    %v345 = vadd.f32 %v289, %v341
    %v347 = vperm.slane %v176, 0
    %v348 = vperm.slane %v176, 1
    %v351 = vmul.f32 %v342, %v347
    %v352 = vmul.f32 %v343, %v348
    %v353 = vmul.f32 %v344, %v347
    %v354 = vmul.f32 %v345, %v348
    %v355 = vadd.f32 %v351, 0.0
    %v356 = vadd.f32 %v352, 0.0
    %v357 = vadd.f32 %v353, 0.0
    %v358 = vadd.f32 %v354, 0.0
    %v359 = vld [vmem:[#allocation2] sm:$0xff]
    %v360 = vld [vmem:[#allocation2 + $0x8] sm:$0xf]
    %v361 = vld [vmem:[#allocation2 + $0x10] sm:$0xff]
    %v362 = vld [vmem:[#allocation2 + $0x18] sm:$0xf]
    %v363 = vld [vmem:[%s3] sm:$0xf]
    %365 = vset.pattern.permute.xlu0 1
    %366 = vperm.xlu0 %365, %v363
    %v367 = vpop.permute.xlu0 %366
    %373 = vst [vmem:[#allocation1] ss:$2 sm:$0xff] %v359
    %s374 = scalar_lea.vmem [#allocation1], 16
    %375 = vst [vmem:[%s374] ss:$2 sm:$0xff] %v360
    %v376 = vld.sshfl [vmem:[#allocation1] sm:$0xff pattern:$0x75316420]
    %v377 = vld.sshfl [vmem:[#allocation1 + $0x8] sm:$0xff pattern:$0x75316420]
    %v378 = vld.sshfl [vmem:[#allocation1 + $0x10] sm:$0xff pattern:$0x75316420]
    %s379 = scalar_lea.vmem [#allocation1], 32
    %380 = vst [vmem:[%s379] ss:$2 sm:$0xff] %v361
    %s381 = scalar_lea.vmem [#allocation1], 48
    %382 = vst [vmem:[%s381] ss:$2 sm:$0xff] %v362
    %v383 = vld.sshfl [vmem:[#allocation1 + $0x20] sm:$0xff pattern:$0x75316420]
    %v384 = vld.sshfl [vmem:[#allocation1 + $0x28] sm:$0xff pattern:$0x75316420]
    %v385 = vld.sshfl [vmem:[#allocation1 + $0x30] sm:$0xff pattern:$0x75316420]
    %386 = vrot.lane.b32.xlu0 %v376, 16
    %v387 = vpop.permute.xlu0 %386
    %388 = vrot.lane.b32.xlu0 %v377, 16
    %v389 = vpop.permute.xlu0 %388
    %390 = vrot.lane.b32.xlu0 %v378, 16
    %v391 = vpop.permute.xlu0 %390
    %392 = vrot.lane.b32.xlu0 %v383, 16
    %v393 = vpop.permute.xlu0 %392
    %394 = vrot.lane.b32.xlu0 %v384, 16
    %v395 = vpop.permute.xlu0 %394
    %396 = vrot.lane.b32.xlu0 %v385, 16
    %v397 = vpop.permute.xlu0 %396
    %vm398 = vcmask 130048
    %v399 = vsel %vm398, %v387, %v389
    %v400 = vsel %vm398, %v389, %v391
    %v401 = vsel %vm398, %v393, %v395
    %v402 = vsel %vm398, %v395, %v397
    %v407 = vmul.f32 %v367, %v399
    %v408 = vmul.f32 %v367, %v400
    %v409 = vmul.f32 %v367, %v401
    %v410 = vmul.f32 %v367, %v402
    %v411 = vadd.f32 %v407, 0.0
    %v412 = vadd.f32 %v408, 0.0
    %v413 = vadd.f32 %v409, 0.0
    %v414 = vadd.f32 %v410, 0.0
    %v415 = vld [vmem:[#allocation2 + $0x4] sm:$0xff]
    %v416 = vld [vmem:[#allocation2 + $0x14] sm:$0xff]
    %v417 = vld [vmem:[%s3] sm:$0xf]
    %419 = vset.pattern.permute.xlu0 4
    %420 = vperm.xlu0 %419, %v417
    %v421 = vpop.permute.xlu0 %420
    %425 = vst [vmem:[#allocation1] ss:$2 sm:$0xff] %v415
    %v426 = vld.sshfl [vmem:[#allocation1] sm:$0xff pattern:$0x75316420]
    %v427 = vld.sshfl [vmem:[#allocation1 + $0x8] sm:$0xff pattern:$0x75316420]
    %s428 = scalar_lea.vmem [#allocation1], 16
    %429 = vst [vmem:[%s428] ss:$2 sm:$0xff] %v416
    %v430 = vld.sshfl [vmem:[#allocation1 + $0x10] sm:$0xff pattern:$0x75316420]
    %v431 = vld.sshfl [vmem:[#allocation1 + $0x18] sm:$0xff pattern:$0x75316420]
    %v436 = vmul.f32 %v421, %v426
    %v437 = vmul.f32 %v421, %v427
    %v438 = vmul.f32 %v421, %v430
    %v439 = vmul.f32 %v421, %v431
    %v440 = vadd.f32 %v411, %v436
    %v441 = vadd.f32 %v412, %v437
    %v442 = vadd.f32 %v413, %v438
    %v443 = vadd.f32 %v414, %v439
    %v444 = vld [vmem:[#allocation2 + $0x4] sm:$0xff]
    %v445 = vld [vmem:[#allocation2 + $0xc] sm:$0xf]
    %v446 = vld [vmem:[#allocation2 + $0x14] sm:$0xff]
    %v447 = vld [vmem:[#allocation2 + $0x1c] sm:$0xf]
    %v448 = vld [vmem:[%s3] sm:$0xf]
    %450 = vset.pattern.permute.xlu0 7
    %451 = vperm.xlu0 %450, %v448
    %v452 = vpop.permute.xlu0 %451
    %458 = vst [vmem:[#allocation1] ss:$2 sm:$0xff] %v444
    %s459 = scalar_lea.vmem [#allocation1], 16
    %460 = vst [vmem:[%s459] ss:$2 sm:$0xff] %v445
    %v461 = vld.sshfl [vmem:[#allocation1] sm:$0xff pattern:$0x75316420]
    %v462 = vld.sshfl [vmem:[#allocation1 + $0x8] sm:$0xff pattern:$0x75316420]
    %v463 = vld.sshfl [vmem:[#allocation1 + $0x10] sm:$0xff pattern:$0x75316420]
    %s464 = scalar_lea.vmem [#allocation1], 32
    %465 = vst [vmem:[%s464] ss:$2 sm:$0xff] %v446
    %s466 = scalar_lea.vmem [#allocation1], 48
    %467 = vst [vmem:[%s466] ss:$2 sm:$0xff] %v447
    %v468 = vld.sshfl [vmem:[#allocation1 + $0x20] sm:$0xff pattern:$0x75316420]
    %v469 = vld.sshfl [vmem:[#allocation1 + $0x28] sm:$0xff pattern:$0x75316420]
    %v470 = vld.sshfl [vmem:[#allocation1 + $0x30] sm:$0xff pattern:$0x75316420]
    %471 = vrot.lane.b32.xlu0 %v461, 112
    %v472 = vpop.permute.xlu0 %471
    %473 = vrot.lane.b32.xlu0 %v462, 112
    %v474 = vpop.permute.xlu0 %473
    %475 = vrot.lane.b32.xlu0 %v463, 112
    %v476 = vpop.permute.xlu0 %475
    %477 = vrot.lane.b32.xlu0 %v468, 112
    %v478 = vpop.permute.xlu0 %477
    %479 = vrot.lane.b32.xlu0 %v469, 112
    %v480 = vpop.permute.xlu0 %479
    %481 = vrot.lane.b32.xlu0 %v470, 112
    %v482 = vpop.permute.xlu0 %481
    %vm483 = vcmask 916480
    %v484 = vsel %vm483, %v472, %v474
    %v485 = vsel %vm483, %v474, %v476
    %v486 = vsel %vm483, %v478, %v480
    %v487 = vsel %vm483, %v480, %v482
    %v492 = vmul.f32 %v452, %v484
    %v493 = vmul.f32 %v452, %v485
    %v494 = vmul.f32 %v452, %v486
    %v495 = vmul.f32 %v452, %v487
    %v496 = vadd.f32 %v440, %v492
    %v497 = vadd.f32 %v441, %v493
    %v498 = vadd.f32 %v442, %v494
    %v499 = vadd.f32 %v443, %v495
    %v500 = vadd.f32 %v355, %v496
    %v501 = vadd.f32 %v356, %v497
    %v502 = vadd.f32 %v357, %v498
    %v503 = vadd.f32 %v358, %v499
    %v504 = vld [vmem:[#allocation2] sm:$0xff]
    %v505 = vld [vmem:[#allocation2 + $0x8] sm:$0xf]
    %v506 = vld [vmem:[#allocation2 + $0x10] sm:$0xff]
    %v507 = vld [vmem:[#allocation2 + $0x18] sm:$0xf]
    %v508 = vld [vmem:[%s3] sm:$0xf]
    %510 = vset.pattern.permute.xlu0 2
    %511 = vperm.xlu0 %510, %v508
    %v512 = vpop.permute.xlu0 %511
    %518 = vst [vmem:[#allocation1] ss:$2 sm:$0xff] %v504
    %s519 = scalar_lea.vmem [#allocation1], 16
    %520 = vst [vmem:[%s519] ss:$2 sm:$0xff] %v505
    %v521 = vld.sshfl [vmem:[#allocation1] sm:$0xff pattern:$0x75316420]
    %v522 = vld.sshfl [vmem:[#allocation1 + $0x8] sm:$0xff pattern:$0x75316420]
    %v523 = vld.sshfl [vmem:[#allocation1 + $0x10] sm:$0xff pattern:$0x75316420]
    %s524 = scalar_lea.vmem [#allocation1], 32
    %525 = vst [vmem:[%s524] ss:$2 sm:$0xff] %v506
    %s526 = scalar_lea.vmem [#allocation1], 48
    %527 = vst [vmem:[%s526] ss:$2 sm:$0xff] %v507
    %v528 = vld.sshfl [vmem:[#allocation1 + $0x20] sm:$0xff pattern:$0x75316420]
    %v529 = vld.sshfl [vmem:[#allocation1 + $0x28] sm:$0xff pattern:$0x75316420]
    %v530 = vld.sshfl [vmem:[#allocation1 + $0x30] sm:$0xff pattern:$0x75316420]
    %531 = vrot.lane.b32.xlu0 %v521, 15
    %v532 = vpop.permute.xlu0 %531
    %533 = vrot.lane.b32.xlu0 %v522, 15
    %v534 = vpop.permute.xlu0 %533
    %535 = vrot.lane.b32.xlu0 %v523, 15
    %v536 = vpop.permute.xlu0 %535
    %537 = vrot.lane.b32.xlu0 %v528, 15
    %v538 = vpop.permute.xlu0 %537
    %539 = vrot.lane.b32.xlu0 %v529, 15
    %v540 = vpop.permute.xlu0 %539
    %541 = vrot.lane.b32.xlu0 %v530, 15
    %v542 = vpop.permute.xlu0 %541
    %vm543 = vcmask 121856
    %v544 = vsel %vm543, %v532, %v534
    %v545 = vsel %vm543, %v534, %v536
    %v546 = vsel %vm543, %v538, %v540
    %v547 = vsel %vm543, %v540, %v542
    %v552 = vmul.f32 %v512, %v544
    %v553 = vmul.f32 %v512, %v545
    %v554 = vmul.f32 %v512, %v546
    %v555 = vmul.f32 %v512, %v547
    %v556 = vadd.f32 %v552, 0.0
    %v557 = vadd.f32 %v553, 0.0
    %v558 = vadd.f32 %v554, 0.0
    %v559 = vadd.f32 %v555, 0.0
    %v560 = vld [vmem:[#allocation2 + $0x4] sm:$0xff]
    %v561 = vld [vmem:[#allocation2 + $0xc] sm:$0xf]
    %v562 = vld [vmem:[#allocation2 + $0x14] sm:$0xff]
    %v563 = vld [vmem:[#allocation2 + $0x1c] sm:$0xf]
    %v564 = vld [vmem:[%s3] sm:$0xf]
    %566 = vset.pattern.permute.xlu0 5
    %567 = vperm.xlu0 %566, %v564
    %v568 = vpop.permute.xlu0 %567
    %574 = vst [vmem:[#allocation1] ss:$2 sm:$0xff] %v560
    %s575 = scalar_lea.vmem [#allocation1], 16
    %576 = vst [vmem:[%s575] ss:$2 sm:$0xff] %v561
    %v577 = vld.sshfl [vmem:[#allocation1] sm:$0xff pattern:$0x75316420]
    %v578 = vld.sshfl [vmem:[#allocation1 + $0x8] sm:$0xff pattern:$0x75316420]
    %v579 = vld.sshfl [vmem:[#allocation1 + $0x10] sm:$0xff pattern:$0x75316420]
    %s580 = scalar_lea.vmem [#allocation1], 32
    %581 = vst [vmem:[%s580] ss:$2 sm:$0xff] %v562
    %s582 = scalar_lea.vmem [#allocation1], 48
    %583 = vst [vmem:[%s582] ss:$2 sm:$0xff] %v563
    %v584 = vld.sshfl [vmem:[#allocation1 + $0x20] sm:$0xff pattern:$0x75316420]
    %v585 = vld.sshfl [vmem:[#allocation1 + $0x28] sm:$0xff pattern:$0x75316420]
    %v586 = vld.sshfl [vmem:[#allocation1 + $0x30] sm:$0xff pattern:$0x75316420]
    %587 = vrot.lane.b32.xlu0 %v577, 127
    %v588 = vpop.permute.xlu0 %587
    %589 = vrot.lane.b32.xlu0 %v578, 127
    %v590 = vpop.permute.xlu0 %589
    %591 = vrot.lane.b32.xlu0 %v579, 127
    %v592 = vpop.permute.xlu0 %591
    %593 = vrot.lane.b32.xlu0 %v584, 127
    %v594 = vpop.permute.xlu0 %593
    %595 = vrot.lane.b32.xlu0 %v585, 127
    %v596 = vpop.permute.xlu0 %595
    %597 = vrot.lane.b32.xlu0 %v586, 127
    %v598 = vpop.permute.xlu0 %597
    %vm599 = vcmask 1039360
    %v600 = vsel %vm599, %v588, %v590
    %v601 = vsel %vm599, %v590, %v592
    %v602 = vsel %vm599, %v594, %v596
    %v603 = vsel %vm599, %v596, %v598
    %v608 = vmul.f32 %v568, %v600
    %v609 = vmul.f32 %v568, %v601
    %v610 = vmul.f32 %v568, %v602
    %v611 = vmul.f32 %v568, %v603
    %v612 = vadd.f32 %v556, %v608
    %v613 = vadd.f32 %v557, %v609
    %v614 = vadd.f32 %v558, %v610
    %v615 = vadd.f32 %v559, %v611
    %v616 = vld [vmem:[#allocation2 + $0x4] sm:$0xff]
    %v617 = vld [vmem:[#allocation2 + $0xc] sm:$0xf]
    %v618 = vld [vmem:[#allocation2 + $0x14] sm:$0xff]
    %v619 = vld [vmem:[#allocation2 + $0x1c] sm:$0xf]
    %v620 = vld [vmem:[%s3] sm:$0xf]
    %622 = vset.pattern.permute.xlu0 8
    %623 = vperm.xlu0 %622, %v620
    %v624 = vpop.permute.xlu0 %623
    %630 = vst [vmem:[#allocation1] ss:$2 sm:$0xff] %v616
    %s631 = scalar_lea.vmem [#allocation1], 16
    %632 = vst [vmem:[%s631] ss:$2 sm:$0xff] %v617
    %v633 = vld.sshfl [vmem:[#allocation1] sm:$0xff pattern:$0x75316420]
    %v634 = vld.sshfl [vmem:[#allocation1 + $0x8] sm:$0xff pattern:$0x75316420]
    %v635 = vld.sshfl [vmem:[#allocation1 + $0x10] sm:$0xff pattern:$0x75316420]
    %s636 = scalar_lea.vmem [#allocation1], 32
    %637 = vst [vmem:[%s636] ss:$2 sm:$0xff] %v618
    %s638 = scalar_lea.vmem [#allocation1], 48
    %639 = vst [vmem:[%s638] ss:$2 sm:$0xff] %v619
    %v640 = vld.sshfl [vmem:[#allocation1 + $0x20] sm:$0xff pattern:$0x75316420]
    %v641 = vld.sshfl [vmem:[#allocation1 + $0x28] sm:$0xff pattern:$0x75316420]
    %v642 = vld.sshfl [vmem:[#allocation1 + $0x30] sm:$0xff pattern:$0x75316420]
    %643 = vrot.lane.b32.xlu0 %v633, 111
    %v644 = vpop.permute.xlu0 %643
    %645 = vrot.lane.b32.xlu0 %v634, 111
    %v646 = vpop.permute.xlu0 %645
    %647 = vrot.lane.b32.xlu0 %v635, 111
    %v648 = vpop.permute.xlu0 %647
    %649 = vrot.lane.b32.xlu0 %v640, 111
    %v650 = vpop.permute.xlu0 %649
    %651 = vrot.lane.b32.xlu0 %v641, 111
    %v652 = vpop.permute.xlu0 %651
    %653 = vrot.lane.b32.xlu0 %v642, 111
    %v654 = vpop.permute.xlu0 %653
    %vm655 = vcmask 908288
    %v656 = vsel %vm655, %v644, %v646
    %v657 = vsel %vm655, %v646, %v648
    %v658 = vsel %vm655, %v650, %v652
    %v659 = vsel %vm655, %v652, %v654
    %v664 = vmul.f32 %v624, %v656
    %v665 = vmul.f32 %v624, %v657
    %v666 = vmul.f32 %v624, %v658
    %v667 = vmul.f32 %v624, %v659
    %v668 = vadd.f32 %v612, %v664
    %v669 = vadd.f32 %v613, %v665
    %v670 = vadd.f32 %v614, %v666
    %v671 = vadd.f32 %v615, %v667
    %v673 = vperm.slane %v177, 0
    %v674 = vperm.slane %v177, 1
    %v677 = vmul.f32 %v668, %v673
    %v678 = vmul.f32 %v669, %v674
    %v679 = vmul.f32 %v670, %v673
    %v680 = vmul.f32 %v671, %v674
    %v681 = vadd.f32 %v500, %v677
    %v682 = vadd.f32 %v501, %v678
    %v683 = vadd.f32 %v502, %v679
    %v684 = vadd.f32 %v503, %v680
    %v685 = vld [vmem:[%s4] sm:$0xf]
    %687 = vset.pattern.permute.xlu0 0
    %688 = vperm.xlu0 %687, %v685
    %v689 = vpop.permute.xlu0 %688
    %v691 = vadd.f32 %v681, %v689
    %v692 = vadd.f32 %v682, %v689
    %v693 = vadd.f32 %v683, %v689
    %v694 = vadd.f32 %v684, %v689
    %v695 = vmax.f32 %v691, 0.0
    %v696 = vmax.f32 %v692, 0.0
    %v697 = vmax.f32 %v693, 0.0
    %v698 = vmax.f32 %v694, 0.0
    %v703 = vrot.slane %v695, 4
    %v704 = vrot.slane %v696, 4
    %v705 = vrot.slane %v697, 4
    %v706 = vrot.slane %v698, 4
    %v711 = vsel %vm169, %v155, %v703
    %v712 = vsel %vm169, %v156, %v704
    %v713 = vsel %vm169, %v157, %v705
    %v714 = vsel %vm169, %v158, %v706
    %715 = vst [vmem:[#allocation6] sm:$0xff] %v711
    %716 = vst [vmem:[#allocation6 + $0x8] sm:$0xff] %v712
    %717 = vst [vmem:[#allocation6 + $0x10] sm:$0xff] %v713
    %718 = vst [vmem:[#allocation6 + $0x18] sm:$0xff] %v714
    // Predicated region
    $region34: #{tpu_custom_call.1} parent=1 // pred_check
      _
    $region35: #{tpu_custom_call.1} parent=1 // pred_check_branch
      %720 = sbr.rel (0) target = $region37
    $region36: #{tpu_custom_call.1} parent=1 // pred_region
      %722 = vsyncadd [#allocation5], 0
      %s723 = sshll.u32 [#allocation6], 4
      %s724 = int_to_ptr.vmem [resolvable:$true] %s723
      %s725 = sshll.u32 %s7, 4
      %s726 = int_to_ptr.hbm [resolvable:$true] %s725
      %731 = dma.vmem_to_hbm [thread:$0]  %s724, 512, %s726, [#allocation5], 256, 256, 16
    $region37: #{tpu_custom_call.1} parent=1 // pred_fallthru
      _
    // Predicated region
    $region38: #{tpu_custom_call.1} parent=1 // pred_check
      _
    $region39: #{tpu_custom_call.1} parent=1 // pred_check_branch
      %733 = sbr.rel (0) target = $region41
    $region40: #{tpu_custom_call.1} parent=1 // pred_region
      %735 = dma.done [#allocation5], 512
    $region41: #{tpu_custom_call.1} parent=1 // pred_fallthru
      _
    %736 = vsyncpa [#allocation4], 1
    %737 = vsyncpa [#allocation5], 1

</llo_original>
